<compile_context>
chip_gen: v5e
topology: v5e:2x2
jax: 0.10.0
libtpu: 0.0.40
codegen_flags: <defaults>
</compile_context>

<pallas_src>
import jax
import jax.numpy as jnp
import numpy as np
from jax.experimental import pallas as pl
from jax.experimental.pallas import tpu as pltpu


# ----------------------------------------------------------------------------
# Pallas kernel: per (batch, token-tile) projection  out = tokens @ W^T + b
# ----------------------------------------------------------------------------
def _proj_kernel(x_ref, w_ref, b_ref, o_ref):
    # x_ref: (TN, Cf)  tokens (channels-last)
    # w_ref: (Cf, E)   1x1-conv weight, pre-transposed
    # b_ref: (1, E)    conv bias
    # o_ref: (TN, E)   lane-dense output tile
    acc = jnp.dot(x_ref[...], w_ref[...], preferred_element_type=jnp.float32)
    acc = acc + b_ref[...].astype(jnp.float32)
    o_ref[...] = acc.astype(o_ref.dtype)


def _pick_token_tile(n):
    """Largest convenient token tile that divides N (falls back to full N)."""
    for cand in (512, 256, 128, 64, 32, 16, 8):
        if n % cand == 0:
            return cand
    return n


def hybrid_embed_proj(feat, proj_w, proj_b):
    """HybridEmbed projection: proj(feat).flatten(2).transpose(1, 2).

    feat:   (B, Cf, Hf, Wf)  CNN backbone feature map
    proj_w: (E, Cf)          nn.Conv2d(Cf, E, 1).weight squeezed to 2-D
    proj_b: (E,)             nn.Conv2d bias
    returns (B, Hf*Wf, E)
    """
    B, Cf, Hf, Wf = feat.shape
    E = proj_w.shape[0]
    N = Hf * Wf

    # flatten(2).transpose(1,2) is done in the wrapper so the kernel's matmul is
    # channel-contracting on the last dim and the output store is full-E lane-dense.
    tokens = feat.reshape(B, Cf, N).transpose(0, 2, 1)      # (B, N, Cf)
    wt = proj_w.T                                           # (Cf, E)
    bias2d = proj_b.reshape(1, E)                           # (1, E)

    tn = _pick_token_tile(N)
    grid = (B, N // tn)

    return pl.pallas_call(
        _proj_kernel,
        out_shape=jax.ShapeDtypeStruct((B, N, E), feat.dtype),
        grid_spec=pltpu.PrefetchScalarGridSpec(
            num_scalar_prefetch=0,
            grid=grid,
            in_specs=[
                # Activations: tiled over (batch, token tile); batch dim squeezed.
                pl.BlockSpec((pl.Squeezed(), tn, Cf), lambda b, t: (b, t, 0)),
                # Weight / bias: constant index_map -> fetched once, stays resident.
                pl.BlockSpec((Cf, E), lambda b, t: (0, 0)),
                pl.BlockSpec((1, E), lambda b, t: (0, 0)),
            ],
            out_specs=pl.BlockSpec((pl.Squeezed(), tn, E), lambda b, t: (b, t, 0)),
        ),
        compiler_params=pltpu.CompilerParams(
            dimension_semantics=("parallel", "parallel"),
        ),
    )(tokens, wt, bias2d)


def hybrid_embed_forward(x_img, backbone_fn, proj_w, proj_b):
    """Full HybridEmbed.forward semantics (backbone runs as plain JAX)."""
    feat = backbone_fn(x_img)
    if isinstance(feat, (list, tuple)):
        feat = feat[-1]
    return hybrid_embed_proj(feat, proj_w, proj_b)


# ----------------------------------------------------------------------------
# Stand-in backbone (external nn.Module in PyTorch) + pure-JAX reference
# ----------------------------------------------------------------------------
def _toy_backbone(x, w, b):
    """Tiny CNN stand-in: 3x3 stride-2 conv + ReLU (NCHW)."""
    y = jax.lax.conv_general_dilated(
        x, w, window_strides=(2, 2), padding="SAME",
        dimension_numbers=("NCHW", "OIHW", "NCHW"))
    y = y + b[None, :, None, None]
    return jax.nn.relu(y)


def _reference_proj(feat, proj_w, proj_b):
    B, Cf, Hf, Wf = feat.shape
    E = proj_w.shape[0]
    y = jnp.einsum("bchw,ec->behw", feat, proj_w) + proj_b[None, :, None, None]
    return y.reshape(B, E, Hf * Wf).transpose(0, 2, 1)


if __name__ == "__main__":
    # Small shapes consistent with the module: image (2, 4, 16, 16),
    # backbone feature map (2, 8, 8, 8) -> num_patches=64, embed_dim=32.
    B, in_chans, H, W = 2, 4, 16, 16
    feature_dim, embed_dim = 8, 32

    key = jax.random.PRNGKey(0)
    kx, kbw, kbb, kpw, kpb = jax.random.split(key, 5)

    x_img = jax.random.normal(kx, (B, in_chans, H, W), dtype=jnp.float32)
    bb_w = jax.random.normal(kbw, (feature_dim, in_chans, 3, 3), dtype=jnp.float32) * 0.1
    bb_b = jax.random.normal(kbb, (feature_dim,), dtype=jnp.float32) * 0.1
    # PyTorch Conv2d(feature_dim, embed_dim, 1).weight has shape (E, Cf, 1, 1);
    # we keep the squeezed (E, Cf) form.
    proj_w = jax.random.normal(kpw, (embed_dim, feature_dim), dtype=jnp.float32) * 0.1
    proj_b = jax.random.normal(kpb, (embed_dim,), dtype=jnp.float32) * 0.1

    backbone_fn = lambda img: _toy_backbone(img, bb_w, bb_b)

    # fp32 run (exactness check).
    out = hybrid_embed_forward(x_img, backbone_fn, proj_w, proj_b)
    out = jax.block_until_ready(out)

    feat = backbone_fn(x_img)
    ref = _reference_proj(feat, proj_w, proj_b)
    np.testing.assert_allclose(np.asarray(out), np.asarray(ref), rtol=1e-5, atol=1e-5)

    # bf16 run: MXU-native operands, fp32 accumulation inside the kernel.
    out_bf16 = hybrid_embed_proj(feat.astype(jnp.bfloat16),
                                 proj_w.astype(jnp.bfloat16),
                                 proj_b.astype(jnp.bfloat16))
    out_bf16 = jax.block_until_ready(out_bf16)
    np.testing.assert_allclose(np.asarray(out_bf16, dtype=np.float32),
                               np.asarray(ref), rtol=2e-2, atol=2e-2)

    print("KERNEL_OK")
</pallas_src>

<mosaic_0001>
module attributes {stable_mosaic.version = 11 : i64} {
  func.func @_proj_kernel(%arg0: i32, %arg1: i32, %arg2: memref<1x64x8xf32, #tpu.memory_space<vmem>>, %arg3: memref<8x32xf32, #tpu.memory_space<vmem>>, %arg4: memref<1x32xf32, #tpu.memory_space<vmem>>, %arg5: memref<1x64x32xf32, #tpu.memory_space<vmem>>) attributes {dimension_semantics = [#tpu.dimension_semantics<parallel>, #tpu.dimension_semantics<parallel>], iteration_bounds = array<i64: 2, 1>, scalar_prefetch = 0 : i64, scratch_operands = 0 : i64, tpu.core_type = #tpu.core_type<tc>, window_params = [{transform_indices = @transform_0, window_bounds = array<i64: 1, 64, 8>}, {pipeline_mode = #tpu.pipeline_mode<synchronous>, transform_indices = @transform_1, window_bounds = array<i64: 8, 32>}, {pipeline_mode = #tpu.pipeline_mode<synchronous>, transform_indices = @transform_2, window_bounds = array<i64: 1, 32>}, {transform_indices = @transform_3, window_bounds = array<i64: 1, 64, 32>}]} {
    %c0 = arith.constant 0 : index
    %c0_0 = arith.constant 0 : index
    %c0_1 = arith.constant 0 : index
    %0 = vector.load %arg2[%c0, %c0_0, %c0_1] : memref<1x64x8xf32, #tpu.memory_space<vmem>>, vector<1x64x8xf32>
    %1 = vector.shape_cast %0 : vector<1x64x8xf32> to vector<64x8xf32>
    %c0_2 = arith.constant 0 : index
    %c0_3 = arith.constant 0 : index
    %2 = vector.load %arg3[%c0_2, %c0_3] : memref<8x32xf32, #tpu.memory_space<vmem>>, vector<8x32xf32>
    %cst = arith.constant dense<0.000000e+00> : vector<64x32xf32>
    %3 = tpu.matmul %1, %2, %cst {dimension_numbers = #tpu.dot_dimension_numbers<[1], [0], [0], [1], [0, 0, 1, 1], [], []>} : vector<64x8xf32>, vector<8x32xf32>, vector<64x32xf32> -> vector<64x32xf32>
    %c0_4 = arith.constant 0 : index
    %c0_5 = arith.constant 0 : index
    %4 = vector.load %arg4[%c0_4, %c0_5] : memref<1x32xf32, #tpu.memory_space<vmem>>, vector<1x32xf32>
    %5 = vector.broadcast %4 : vector<1x32xf32> to vector<64x32xf32>
    %6 = arith.addf %3, %5 : vector<64x32xf32>
    %c0_6 = arith.constant 0 : index
    %c0_7 = arith.constant 0 : index
    %c0_8 = arith.constant 0 : index
    %7 = vector.load %arg5[%c0_6, %c0_7, %c0_8] : memref<1x64x32xf32, #tpu.memory_space<vmem>>, vector<1x64x32xf32>
    %8 = vector.shape_cast %7 : vector<1x64x32xf32> to vector<64x32xf32>
    %9 = vector.shape_cast %6 : vector<64x32xf32> to vector<1x64x32xf32>
    tpu.vector_store %arg5[%c0_6, %c0_7, %c0_8], %9 {strides = array<i32>} : memref<1x64x32xf32, #tpu.memory_space<vmem>>, vector<1x64x32xf32>,
    return
  }
  func.func @transform_0(%arg0: i32, %arg1: i32) -> (i32, i32, i32) {
    %c0_i32 = arith.constant 0 : i32
    %c0_i32_0 = arith.constant 0 : i32
    return %arg0, %arg1, %c0_i32 : i32, i32, i32
  }
  func.func @transform_1(%arg0: i32, %arg1: i32) -> (i32, i32) {
    %c0_i32 = arith.constant 0 : i32
    %c0_i32_0 = arith.constant 0 : i32
    %c0_i32_1 = arith.constant 0 : i32
    return %c0_i32, %c0_i32_0 : i32, i32
  }
  func.func @transform_2(%arg0: i32, %arg1: i32) -> (i32, i32) {
    %c0_i32 = arith.constant 0 : i32
    %c0_i32_0 = arith.constant 0 : i32
    %c0_i32_1 = arith.constant 0 : i32
    return %c0_i32, %c0_i32_0 : i32, i32
  }
  func.func @transform_3(%arg0: i32, %arg1: i32) -> (i32, i32, i32) {
    %c0_i32 = arith.constant 0 : i32
    %c0_i32_0 = arith.constant 0 : i32
    return %arg0, %arg1, %c0_i32 : i32, i32, i32
  }
}

</mosaic_0001>

<llo_original>
// kernel: tpu_custom_call.1
$region0: #{tpu_custom_call.1}
  #allocation0 [shape = 'u32[]', space=smem, size = 0x4, offset = 0x4, fixed_abs, tag = 'smem constant byte address 0x4 - core index']
  #allocation1 [shape = 'u32[72,128]{1,0:T(1,128)}', space=vmem, size = 0x9000, scoped, tag = 'internal scratch']
  %s0 = inlined_call_operand.vmem [shape: f32[2,64,8], index: 0, kind: input, shape index: {}]
  %s1 = inlined_call_operand.vmem [shape: f32[8,32], index: 1, kind: input, shape index: {}]
  %s2 = inlined_call_operand.vmem [shape: f32[1,32], index: 2, kind: input, shape index: {}]
  %s3 = inlined_call_operand.vmem [shape: f32[2,64,32], index: 3, kind: output, shape index: {}]
  %s4 = sld [smem:[#allocation0]]
  $region45: #{tpu_custom_call.1} parent=0
    _
  %s6 = ssub.s32 1, %s4
  %s7 = scalar_select 0, %s6, %s4
  loop: start=0, step=1, limit=4
  $region2: #{tpu_custom_call.1} parent=0 // loop_pre_header
    _
  $region3: #{tpu_custom_call.1} parent=0 // loop_header
    %s9 = sphi 0, %s13
    %p10 = scmp.ge.s32.totalorder %s9, 4
    %s16 = sphi 0, %s28
    %s17 = sphi 0, %s24
    %s18 = sphi 0, %s16
    %s19 = sphi 0, %s17
    %s20 = sphi 0, %s18
    %s21 = sphi 0, %s19
    %s33 = sphi 0, %s35
    %s36 = sphi 0, %s33
    %s37 = sphi 0, %s36
    %s53 = sphi 0, %s37
    %s57 = sphi 0, %s57
    %s59 = sphi 0, %s57
    %s60 = sphi 0, %s59
    %s74 = sphi 0, %s60
    %s78 = sphi 0, %s78
    %s80 = sphi 0, %s78
    %s81 = sphi 0, %s80
    %s95 = sphi 0, %s81
    %s103 = sphi 0, %s105
    %s106 = sphi 0, %s103
    %s107 = sphi 0, %s106
    %s123 = sphi 0, %s107
  $region4: #{tpu_custom_call.1} parent=0 // loop_header_branch
    %12 = sbr.rel (%p10) target = $region8
  $region5: #{tpu_custom_call.1} parent=0 // loop_body
    %s14 = ssub.s32 %s9, 1
    %s15 = ssub.s32 %s9, 2
    %s22 = sadd.s32 1, %s17
    %p23 = scmp.ge.s32.totalorder %s22, 1
    %s24 = scalar_select %p23, 0, %s22
    %s25 = sadd.s32 1, %s16
    %s26 = scalar_select %p23, %s25, %s16
    %p27 = scmp.ge.s32.totalorder %s26, 2
    %s28 = scalar_select %p27, 0, %s26
    %s29 = ssub.s32 %s16, %s28
    %s30 = ssub.s32 %s17, %s24
    %s31 = sor.u32 %s29, %s30
    %p32 = scmp.eq.s32.totalorder %s31, 0
    %s34 = sadd.s32 %s33, 1
    %s35 = scalar_select %p32, %s33, %s34
    %p38 = pneg %p32
    %p39 = scmp.eq.s32.totalorder %s9, 1
    %p40 = por %p38, %p39
    %p41 = scmp.ne.s32.totalorder %s33, %s36
    %p42 = scmp.eq.s32.totalorder %s9, 0
    %p43 = por %p41, %p42
    %p44 = scmp.ne.s32.totalorder %s33, %s36
    %p45 = scmp.eq.s32.totalorder %s14, 1
    %p46 = por %p44, %p45
    %p47 = scmp.ne.s32.totalorder %s36, %s37
    %p48 = scmp.eq.s32.totalorder %s14, 0
    %p49 = por %p47, %p48
    %p50 = scmp.ne.s32.totalorder %s36, %s37
    %p51 = scmp.eq.s32.totalorder %s15, 1
    %p52 = por %p50, %p51
    %p54 = scmp.ne.s32.totalorder %s37, %s53
    %p55 = scmp.eq.s32.totalorder %s15, 0
    %p56 = por %p54, %p55
    %s58 = sadd.s32 %s57, 1
    %p61 = scmp.eq.s32.totalorder %s9, 1
    %p62 = scmp.ne.s32.totalorder %s57, %s59
    %p63 = scmp.eq.s32.totalorder %s9, 0
    %p64 = por %p62, %p63
    %p65 = scmp.ne.s32.totalorder %s57, %s59
    %p66 = scmp.eq.s32.totalorder %s14, 1
    %p67 = por %p65, %p66
    %p68 = scmp.ne.s32.totalorder %s59, %s60
    %p69 = scmp.eq.s32.totalorder %s14, 0
    %p70 = por %p68, %p69
    %p71 = scmp.ne.s32.totalorder %s59, %s60
    %p72 = scmp.eq.s32.totalorder %s15, 1
    %p73 = por %p71, %p72
    %p75 = scmp.ne.s32.totalorder %s60, %s74
    %p76 = scmp.eq.s32.totalorder %s15, 0
    %p77 = por %p75, %p76
    %s79 = sadd.s32 %s78, 1
    %p82 = scmp.eq.s32.totalorder %s9, 1
    %p83 = scmp.ne.s32.totalorder %s78, %s80
    %p84 = scmp.eq.s32.totalorder %s9, 0
    %p85 = por %p83, %p84
    %p86 = scmp.ne.s32.totalorder %s78, %s80
    %p87 = scmp.eq.s32.totalorder %s14, 1
    %p88 = por %p86, %p87
    %p89 = scmp.ne.s32.totalorder %s80, %s81
    %p90 = scmp.eq.s32.totalorder %s14, 0
    %p91 = por %p89, %p90
    %p92 = scmp.ne.s32.totalorder %s80, %s81
    %p93 = scmp.eq.s32.totalorder %s15, 1
    %p94 = por %p92, %p93
    %p96 = scmp.ne.s32.totalorder %s81, %s95
    %p97 = scmp.eq.s32.totalorder %s15, 0
    %p98 = por %p96, %p97
    %s99 = ssub.s32 %s16, %s28
    %s100 = ssub.s32 %s17, %s24
    %s101 = sor.u32 %s99, %s100
    %p102 = scmp.eq.s32.totalorder %s101, 0
    %s104 = sadd.s32 %s103, 1
    %s105 = scalar_select %p102, %s103, %s104
    %p108 = pneg %p102
    %p109 = scmp.eq.s32.totalorder %s9, 1
    %p110 = por %p108, %p109
    %p111 = scmp.ne.s32.totalorder %s103, %s106
    %p112 = scmp.eq.s32.totalorder %s9, 0
    %p113 = por %p111, %p112
    %p114 = scmp.ne.s32.totalorder %s103, %s106
    %p115 = scmp.eq.s32.totalorder %s14, 1
    %p116 = por %p114, %p115
    %p117 = scmp.ne.s32.totalorder %s106, %s107
    %p118 = scmp.eq.s32.totalorder %s14, 0
    %p119 = por %p117, %p118
    %p120 = scmp.ne.s32.totalorder %s106, %s107
    %p121 = scmp.eq.s32.totalorder %s15, 1
    %p122 = por %p120, %p121
    %p124 = scmp.ne.s32.totalorder %s107, %s123
    %p125 = scmp.eq.s32.totalorder %s15, 0
    %p126 = por %p124, %p125
    %p127 = scmp.le.s32.totalorder 1, %s9
    %p128 = scmp.lt.s32.totalorder %s9, 3
    %p129 = pnand %p127, %p128
    %p130 = pneg %p129
    // Predicated region
    $region9: #{tpu_custom_call.1} parent=5 // pred_check
      _
    $region10: #{tpu_custom_call.1} parent=5 // pred_check_branch
      %132 = sbr.rel (%p129) target = $region12
    $region11: #{tpu_custom_call.1} parent=5 // pred_region
      %s133 = ssub.s32 %s9, 1
      // Predicated region
      $region13: #{tpu_custom_call.1} parent=11 // pred_check
        %p134 = pneg %p70
      $region14: #{tpu_custom_call.1} parent=11 // pred_check_branch
        %136 = sbr.rel (%p134) target = $region16
      $region15: #{tpu_custom_call.1} parent=11 // pred_region
        _
      $region16: #{tpu_custom_call.1} parent=11 // pred_fallthru
        _
      // Predicated region
      $region17: #{tpu_custom_call.1} parent=11 // pred_check
        %p137 = pneg %p91
      $region18: #{tpu_custom_call.1} parent=11 // pred_check_branch
        %139 = sbr.rel (%p137) target = $region20
      $region19: #{tpu_custom_call.1} parent=11 // pred_region
        _
      $region20: #{tpu_custom_call.1} parent=11 // pred_fallthru
        _
    $region12: #{tpu_custom_call.1} parent=5 // pred_fallthru
      _
    %p140 = scmp.lt.s32.totalorder %s9, 2
    // Predicated region
    $region21: #{tpu_custom_call.1} parent=5 // pred_check
      %p141 = pneg %p140
    $region22: #{tpu_custom_call.1} parent=5 // pred_check_branch
      %143 = sbr.rel (%p141) target = $region24
    $region23: #{tpu_custom_call.1} parent=5 // pred_region
      // Predicated region
      $region25: #{tpu_custom_call.1} parent=23 // pred_check
        %p144 = pneg %p43
      $region26: #{tpu_custom_call.1} parent=23 // pred_check_branch
        %146 = sbr.rel (%p144) target = $region28
      $region27: #{tpu_custom_call.1} parent=23 // pred_region
        %s147 = smul.u32 8, %s17
        %p148 = scmp.lt.s32.totalorder %s16, 1
        %s149 = scalar_select %p148, %s16, 1
        %p150 = scmp.lt.s32.totalorder %s147, 7
        %s151 = scalar_select %p150, %s147, 7
        %s152 = smul.addr %s149, 8
        %s153 = sadd.s32 %s151, %s152
        %s154 = smul.addr %s153, 8
        %s155 = scalar_lea.vmem %s0, %s154
        %s156 = smul.u32 8, %s17
      $region28: #{tpu_custom_call.1} parent=23 // pred_fallthru
        _
    $region24: #{tpu_custom_call.1} parent=5 // pred_fallthru
      _
    %p157 = scmp.le.s32.totalorder 1, %s9
    %p158 = scmp.lt.s32.totalorder %s9, 3
    %p159 = pnand %p157, %p158
    %p160 = pneg %p159
    // Predicated region
    $region29: #{tpu_custom_call.1} parent=5 // pred_check
      _
    $region30: #{tpu_custom_call.1} parent=5 // pred_check_branch
      %162 = sbr.rel (%p159) target = $region32
    $region31: #{tpu_custom_call.1} parent=5 // pred_region
      %s163 = ssub.s32 %s9, 1
      %s164 = smul.u32 8, %s19
      %p165 = scmp.lt.s32.totalorder %s18, 1
      %s166 = scalar_select %p165, %s18, 1
      %p167 = scmp.lt.s32.totalorder %s164, 7
      %s168 = scalar_select %p167, %s164, 7
      %s169 = smul.addr %s166, 8
      %s170 = sadd.s32 %s168, %s169
      %s171 = smul.addr %s170, 8
      %s172 = scalar_lea.vmem %s0, %s171
      %p173 = pneg %p49
      %p174 = pneg %p46
      %p175 = pneg %p70
      %p176 = pneg %p67
      %p177 = pneg %p91
      %p178 = pneg %p88
      %p179 = pneg %p119
      %p180 = pneg %p116
      %s181 = smul.u32 8, %s19
      %p182 = scmp.lt.s32.totalorder %s18, 1
      %s183 = scalar_select %p182, %s18, 1
      %p184 = scmp.lt.s32.totalorder %s181, 7
      %s185 = scalar_select %p184, %s181, 7
      %s186 = smul.addr %s183, 8
      %s187 = sadd.s32 %s185, %s186
      %s188 = smul.addr %s187, 8
      %s189 = scalar_lea.vmem %s3, %s188
      %s190 = smul.u32 8, %s19
      %p191 = scmp.lt.s32.totalorder %s18, 1
      %s192 = scalar_select %p191, %s18, 1
      %p193 = scmp.lt.s32.totalorder %s190, 7
      %s194 = scalar_select %p193, %s190, 7
      %s195 = smul.addr %s192, 8
      %s196 = sadd.s32 %s194, %s195
      %s197 = smul.addr %s196, 8
      %s198 = scalar_lea.vmem %s0, %s197
      %s199 = smul.u32 8, %s19
      %s200 = smul.u32 8, %s19
      %p201 = scmp.lt.s32.totalorder %s18, 1
      %s202 = scalar_select %p201, %s18, 1
      %p203 = scmp.lt.s32.totalorder %s200, 7
      %s204 = scalar_select %p203, %s200, 7
      %s205 = smul.addr %s202, 8
      %s206 = sadd.s32 %s204, %s205
      %s207 = smul.addr %s206, 8
      %s208 = scalar_lea.vmem %s3, %s207
      %s209 = smul.u32 8, %s19
      %v210 = vld [vmem:[%s198] sm:$0xff]
      %v211 = vld [vmem:[%s198 + $0x8] sm:$0xff]
      %v212 = vld [vmem:[%s198 + $0x10] sm:$0xff]
      %v213 = vld [vmem:[%s198 + $0x18] sm:$0xff]
      %v214 = vld [vmem:[%s198 + $0x20] sm:$0xff]
      %v215 = vld [vmem:[%s198 + $0x28] sm:$0xff]
      %v216 = vld [vmem:[%s198 + $0x30] sm:$0xff]
      %v217 = vld [vmem:[%s198 + $0x38] sm:$0xff]
      %v218 = vld [vmem:[%s1] sm:$0xff]
      %v219 = vld [vmem:[%s2] sm:$0x1]
      %v221 = vperm.slane %v219, 0
      %vm223 = vcmask 64512
      %v225 = vsel %vm223, %v210, 0
      %v228 = vsel %vm223, %v211, 0
      %v231 = vsel %vm223, %v212, 0
      %v234 = vsel %vm223, %v213, 0
      %v237 = vsel %vm223, %v214, 0
      %v240 = vsel %vm223, %v215, 0
      %v243 = vsel %vm223, %v216, 0
      %v246 = vsel %vm223, %v217, 0
      %248 = vmatpush.msra.mxu0 0.0
      %249 = vmatpush.msra.mxu0 0.0
      %250 = vmatpush.msra.mxu0 0.0
      %251 = vmatpush.msra.mxu0 0.0
      %252 = vmatpush.msra.mxu0 0.0
      %253 = vmatpush.msra.mxu0 0.0
      %254 = vmatpush.msra.mxu0 0.0
      %255 = vmatpush.msra.mxu0 0.0
      %256 = vmatpush.msra.mxu0 0.0
      %257 = vmatpush.msra.mxu0 0.0
      %258 = vmatpush.msra.mxu0 0.0
      %259 = vmatpush.msra.mxu0 0.0
      %260 = vmatpush.msra.mxu0 0.0
      %261 = vmatpush.msra.mxu0 0.0
      %262 = vmatpush.msra.mxu0 0.0
      %263 = vmatpush.msra.mxu0 %v218
      %264 = vmatmul.f32.gmra.mxu0 %v225
      %v265 = vpop.f32.mrf.mxu0
      %v266 = vadd.f32 %v221, %v265
      %267 = vmatmul.f32.gmra.mxu0 %v228
      %v268 = vpop.f32.mrf.mxu0
      %v269 = vadd.f32 %v221, %v268
      %270 = vmatmul.f32.gmra.mxu0 %v231
      %v271 = vpop.f32.mrf.mxu0
      %v272 = vadd.f32 %v221, %v271
      %273 = vmatmul.f32.gmra.mxu0 %v234
      %v274 = vpop.f32.mrf.mxu0
      %v275 = vadd.f32 %v221, %v274
      %276 = vmatmul.f32.gmra.mxu0 %v237
      %v277 = vpop.f32.mrf.mxu0
      %v278 = vadd.f32 %v221, %v277
      %279 = vmatmul.f32.gmra.mxu0 %v240
      %v280 = vpop.f32.mrf.mxu0
      %v281 = vadd.f32 %v221, %v280
      %282 = vmatmul.f32.gmra.mxu0 %v243
      %v283 = vpop.f32.mrf.mxu0
      %v284 = vadd.f32 %v221, %v283
      %285 = vmatmul.f32.gmra.mxu0 %v246
      %v286 = vpop.f32.mrf.mxu0
      %v287 = vadd.f32 %v221, %v286
      %288 = vdwg.mxu0
      %vm289 = vcmask 261120
      %290 = vst.msk [vmem:[%s208] sm:$0xff] %vm289, %v266
      %291 = vst.msk [vmem:[%s208 + $0x8] sm:$0xff] %vm289, %v269
      %292 = vst.msk [vmem:[%s208 + $0x10] sm:$0xff] %vm289, %v272
      %293 = vst.msk [vmem:[%s208 + $0x18] sm:$0xff] %vm289, %v275
      %294 = vst.msk [vmem:[%s208 + $0x20] sm:$0xff] %vm289, %v278
      %295 = vst.msk [vmem:[%s208 + $0x28] sm:$0xff] %vm289, %v281
      %296 = vst.msk [vmem:[%s208 + $0x30] sm:$0xff] %vm289, %v284
      %297 = vst.msk [vmem:[%s208 + $0x38] sm:$0xff] %vm289, %v287
      %s298 = smul.u32 8, %s19
      %p299 = scmp.lt.s32.totalorder %s18, 1
      %s300 = scalar_select %p299, %s18, 1
      %p301 = scmp.lt.s32.totalorder %s298, 7
      %s302 = scalar_select %p301, %s298, 7
      %s303 = smul.addr %s300, 8
      %s304 = sadd.s32 %s302, %s303
      %s305 = smul.addr %s304, 8
      %s306 = scalar_lea.vmem %s3, %s305
      // Predicated region
      $region33: #{tpu_custom_call.1} parent=31 // pred_check
        %p307 = pneg %p116
      $region34: #{tpu_custom_call.1} parent=31 // pred_check_branch
        %309 = sbr.rel (%p307) target = $region36
      $region35: #{tpu_custom_call.1} parent=31 // pred_region
        %s310 = smul.u32 8, %s19
      $region36: #{tpu_custom_call.1} parent=31 // pred_fallthru
        _
    $region32: #{tpu_custom_call.1} parent=5 // pred_fallthru
      _
    %p311 = scmp.le.s32.totalorder 2, %s9
    // Predicated region
    $region37: #{tpu_custom_call.1} parent=5 // pred_check
      %p312 = pneg %p311
    $region38: #{tpu_custom_call.1} parent=5 // pred_check_branch
      %314 = sbr.rel (%p312) target = $region40
    $region39: #{tpu_custom_call.1} parent=5 // pred_region
      %s315 = ssub.s32 %s9, 2
      // Predicated region
      $region41: #{tpu_custom_call.1} parent=39 // pred_check
        %p316 = pneg %p122
      $region42: #{tpu_custom_call.1} parent=39 // pred_check_branch
        %318 = sbr.rel (%p316) target = $region44
      $region43: #{tpu_custom_call.1} parent=39 // pred_region
        %s319 = smul.u32 8, %s21
        %p320 = scmp.lt.s32.totalorder %s20, 1
        %s321 = scalar_select %p320, %s20, 1
        %p322 = scmp.lt.s32.totalorder %s319, 7
        %s323 = scalar_select %p322, %s319, 7
        %s324 = smul.addr %s321, 8
        %s325 = sadd.s32 %s323, %s324
        %s326 = smul.addr %s325, 8
        %s327 = scalar_lea.vmem %s3, %s326
      $region44: #{tpu_custom_call.1} parent=39 // pred_fallthru
        _
    $region40: #{tpu_custom_call.1} parent=5 // pred_fallthru
      _
  $region6: #{tpu_custom_call.1} parent=0 // loop_footer
    %s13 = sadd.s32 1, %s9
  $region7: #{tpu_custom_call.1} parent=0 // loop_footer_branch
    %8 = sbr.rel target = $region3
  $region8: #{tpu_custom_call.1} parent=0 // loop_exit
    _

</llo_original>
